<compile_context>
chip_gen: v7x
topology: tpu7x:2x2x1
jax: 0.10.0
libtpu: 0.0.40
codegen_flags: <defaults>
</compile_context>

<pallas_src>
import functools

import jax
import jax.numpy as jnp
from jax import lax
from jax.experimental import pallas as pl
from jax.experimental.pallas import tpu as pltpu


def _round_up(v, m):
    return ((v + m - 1) // m) * m


def _mlp_kernel(x_ref,
                w1_ref, b1_ref,
                w2_ref, b2_ref,
                w3_ref, b3_ref,
                w4_ref, b4_ref,
                o_ref,
                *, chunk):
    """Whole MLP on one batch tile.

    x_ref : [tile_b, d_in]  natural (batch-major) layout straight from HBM.
    wN_ref: [out_N, in_N];  bN_ref: [out_N, 1].
    o_ref : [d_out, tile_b] feature-major, batch on the lane axis (dense stores).
    """
    tile = x_ref.shape[0]

    # Hoist the (tiny) parameter loads out of the chunk loop.
    w1 = w1_ref[...]; b1 = b1_ref[...]
    w2 = w2_ref[...]; b2 = b2_ref[...]
    w3 = w3_ref[...]; b3 = b3_ref[...]
    w4 = w4_ref[...]; b4 = b4_ref[...]

    # Layer 1 contracts W1's in-features against the *minor* dim of the
    # natural [chunk, d_in] slab (dot(A, B^T) form), fusing the HBM-layout
    # pivot into the MXU op instead of a separate XLA transpose pass.
    dn_bt = (((1,), (1,)), ((), ()))

    # Static Python loop over lane sub-chunks: keeps the 4-layer activation
    # chain in vregs and gives the scheduler fully static slice offsets.
    for c0 in range(0, tile, chunk):
        cs = min(chunk, tile - c0)
        xc = x_ref[pl.ds(c0, cs), :]                                   # [cs, d_in]

        h = lax.dot_general(w1, xc, dn_bt,
                            preferred_element_type=jnp.float32) + b1   # [32, cs]
        h = jnp.maximum(h, 0.0)
        h = jnp.dot(w2, h, preferred_element_type=jnp.float32) + b2    # [16, cs]
        h = jnp.maximum(h, 0.0)
        h = jnp.dot(w3, h, preferred_element_type=jnp.float32) + b3    # [8, cs]
        h = jnp.maximum(h, 0.0)
        h = jnp.dot(w4, h, preferred_element_type=jnp.float32) + b4    # [d_out, cs]

        o_ref[:, pl.ds(c0, cs)] = h.astype(o_ref.dtype)


def net_forward(x, params, *, tile_b=16384, chunk=256, feature_major_out=False):
    """Run the Net forward pass with a Pallas kernel.

    x: [B, d_in] float32 (any B).
    params: dict with w1..w4 stored [out, in] and b1..b4 stored [out, 1].
    Returns [B, d_out] float32 (or [d_out, B] if feature_major_out=True).
    """
    B, d_in = x.shape
    d_out = params["w4"].shape[0]

    if B <= 1024:
        # Small batch: one whole-batch block, grid=(1,).
        tile = B
        steps = 1
    else:
        # Even number of grid steps (>= 2) so both v7x TensorCores get work;
        # tile is a multiple of 128 so output stores stay lane-dense.
        steps = 2 * pl.cdiv(B, 2 * tile_b)
        tile = _round_up(pl.cdiv(B, steps), 128)
        steps = pl.cdiv(B, tile)   # == steps; final (partial) block is masked.

    grid = (steps,)

    # VMEM budget: double-buffered x blocks (d_in lane-pads to 128) + output
    # blocks + params/slack.  Stays <= 32 MiB at the default tile so it is
    # safe on v7x (64 MiB physical); larger tiles on v5e/v6e raise the limit.
    est = (2 * tile * _round_up(d_in, 128) * 4
           + 2 * _round_up(d_out, 8) * _round_up(tile, 128) * 4
           + (4 << 20))
    vmem_limit = int(min(100 << 20, max(32 << 20, est)))

    def _const(arr):
        # Full-extent block with a constant index -> DMA'd once, VMEM-resident.
        return pl.BlockSpec(arr.shape, lambda i: (0,) * arr.ndim)

    kernel = functools.partial(_mlp_kernel, chunk=chunk)

    out_t = pl.pallas_call(
        kernel,
        out_shape=jax.ShapeDtypeStruct((d_out, B), jnp.float32),
        grid=grid,
        in_specs=[
            pl.BlockSpec((tile, d_in), lambda i: (i, 0)),   # natural x blocks
            _const(params["w1"]), _const(params["b1"]),
            _const(params["w2"]), _const(params["b2"]),
            _const(params["w3"]), _const(params["b3"]),
            _const(params["w4"]), _const(params["b4"]),
        ],
        out_specs=pl.BlockSpec((d_out, tile), lambda i: (0, i)),
        compiler_params=pltpu.CompilerParams(
            dimension_semantics=("parallel",),
            vmem_limit_bytes=vmem_limit,
        ),
    )(x, params["w1"], params["b1"], params["w2"], params["b2"],
      params["w3"], params["b3"], params["w4"], params["b4"])

    if feature_major_out:
        return out_t                       # [d_out, B], no extra HBM pass
    return jnp.transpose(out_t)            # [B, d_out]


def _kaiming_normal_fan_out(key, in_features, out_features, a=0.2):
    """Matches torch.nn.init.kaiming_normal_(a=0.2, mode='fan_out',
    nonlinearity='leaky_relu') for a weight of shape [out, in]."""
    gain = (2.0 / (1.0 + a * a)) ** 0.5
    std = gain / (out_features ** 0.5)                  # fan_out = out_features
    return std * jax.random.normal(
        key, (out_features, in_features), dtype=jnp.float32)


def init_net_params(key, features, feature_division):
    d_in = features - feature_division
    initial_neurons = 32
    dims = [d_in,
            initial_neurons,
            initial_neurons // 2,
            initial_neurons // 4,
            feature_division]
    params = {}
    keys = jax.random.split(key, 4)
    for li in range(4):
        fan_in, fan_out = dims[li], dims[li + 1]
        params[f"w{li + 1}"] = _kaiming_normal_fan_out(keys[li], fan_in, fan_out)
        params[f"b{li + 1}"] = jnp.zeros((fan_out, 1), dtype=jnp.float32)
    return params


def net_forward_ref(x, params):
    """Plain-JAX reference (row-major convention) for correctness checking."""
    h = jnp.maximum(x @ params["w1"].T + params["b1"].T, 0.0)
    h = jnp.maximum(h @ params["w2"].T + params["b2"].T, 0.0)
    h = jnp.maximum(h @ params["w3"].T + params["b3"].T, 0.0)
    return h @ params["w4"].T + params["b4"].T


if __name__ == "__main__":
    # Shapes consistent with the module: features=24, feature_division=8
    # => MLP 16 -> 32 -> 16 -> 8 -> 8.
    features = 24
    feature_division = 8
    d_in = features - feature_division

    key = jax.random.PRNGKey(0)
    k_params, k_x1, k_x2 = jax.random.split(key, 3)
    params = init_net_params(k_params, features, feature_division)

    # 1) Small single-block path (grid=(1,)).
    x_small = jax.random.normal(k_x1, (16, d_in), dtype=jnp.float32)
    out_small = jax.block_until_ready(net_forward(x_small, params))
    ref_small = net_forward_ref(x_small, params)
    assert out_small.shape == (16, feature_division)
    assert jnp.allclose(out_small, ref_small, atol=1e-5, rtol=1e-5), \
        "small-batch mismatch vs reference"

    # 2) Multi-tile path with a ragged batch: exercises the even-step grid
    #    (v7x) and masking of the partial final block (no padding copy).
    x_big = jax.random.normal(k_x2, (2500, d_in), dtype=jnp.float32)
    out_big = jax.block_until_ready(net_forward(x_big, params))
    ref_big = net_forward_ref(x_big, params)
    assert out_big.shape == (2500, feature_division)
    assert jnp.allclose(out_big, ref_big, atol=1e-5, rtol=1e-5), \
        "large-batch mismatch vs reference"

    print("KERNEL_OK")
</pallas_src>

<mosaic_0001>
module attributes {stable_mosaic.version = 11 : i64} {
  func.func @_mlp_kernel(%arg0: i32, %arg1: memref<16x16xf32, #tpu.memory_space<vmem>>, %arg2: memref<32x16xf32, #tpu.memory_space<vmem>>, %arg3: memref<32x1xf32, #tpu.memory_space<vmem>>, %arg4: memref<16x32xf32, #tpu.memory_space<vmem>>, %arg5: memref<16x1xf32, #tpu.memory_space<vmem>>, %arg6: memref<8x16xf32, #tpu.memory_space<vmem>>, %arg7: memref<8x1xf32, #tpu.memory_space<vmem>>, %arg8: memref<8x8xf32, #tpu.memory_space<vmem>>, %arg9: memref<8x1xf32, #tpu.memory_space<vmem>>, %arg10: memref<8x16xf32, #tpu.memory_space<vmem>>) attributes {dimension_semantics = [#tpu.dimension_semantics<parallel>], iteration_bounds = array<i64: 1>, scalar_prefetch = 0 : i64, scratch_operands = 0 : i64, tpu.core_type = #tpu.core_type<tc>, window_params = [{transform_indices = @transform_0, window_bounds = array<i64: 16, 16>}, {pipeline_mode = #tpu.pipeline_mode<synchronous>, transform_indices = @transform_1, window_bounds = array<i64: 32, 16>}, {pipeline_mode = #tpu.pipeline_mode<synchronous>, transform_indices = @transform_2, window_bounds = array<i64: 32, 1>}, {pipeline_mode = #tpu.pipeline_mode<synchronous>, transform_indices = @transform_3, window_bounds = array<i64: 16, 32>}, {pipeline_mode = #tpu.pipeline_mode<synchronous>, transform_indices = @transform_4, window_bounds = array<i64: 16, 1>}, {pipeline_mode = #tpu.pipeline_mode<synchronous>, transform_indices = @transform_5, window_bounds = array<i64: 8, 16>}, {pipeline_mode = #tpu.pipeline_mode<synchronous>, transform_indices = @transform_6, window_bounds = array<i64: 8, 1>}, {pipeline_mode = #tpu.pipeline_mode<synchronous>, transform_indices = @transform_7, window_bounds = array<i64: 8, 8>}, {pipeline_mode = #tpu.pipeline_mode<synchronous>, transform_indices = @transform_8, window_bounds = array<i64: 8, 1>}, {transform_indices = @transform_9, window_bounds = array<i64: 8, 16>}]} {
    %c0 = arith.constant 0 : index
    %c0_0 = arith.constant 0 : index
    %0 = vector.load %arg2[%c0, %c0_0] : memref<32x16xf32, #tpu.memory_space<vmem>>, vector<32x16xf32>
    %c0_1 = arith.constant 0 : index
    %c0_2 = arith.constant 0 : index
    %1 = vector.load %arg3[%c0_1, %c0_2] : memref<32x1xf32, #tpu.memory_space<vmem>>, vector<32x1xf32>
    %c0_3 = arith.constant 0 : index
    %c0_4 = arith.constant 0 : index
    %2 = vector.load %arg4[%c0_3, %c0_4] : memref<16x32xf32, #tpu.memory_space<vmem>>, vector<16x32xf32>
    %c0_5 = arith.constant 0 : index
    %c0_6 = arith.constant 0 : index
    %3 = vector.load %arg5[%c0_5, %c0_6] : memref<16x1xf32, #tpu.memory_space<vmem>>, vector<16x1xf32>
    %c0_7 = arith.constant 0 : index
    %c0_8 = arith.constant 0 : index
    %4 = vector.load %arg6[%c0_7, %c0_8] : memref<8x16xf32, #tpu.memory_space<vmem>>, vector<8x16xf32>
    %c0_9 = arith.constant 0 : index
    %c0_10 = arith.constant 0 : index
    %5 = vector.load %arg7[%c0_9, %c0_10] : memref<8x1xf32, #tpu.memory_space<vmem>>, vector<8x1xf32>
    %c0_11 = arith.constant 0 : index
    %c0_12 = arith.constant 0 : index
    %6 = vector.load %arg8[%c0_11, %c0_12] : memref<8x8xf32, #tpu.memory_space<vmem>>, vector<8x8xf32>
    %c0_13 = arith.constant 0 : index
    %c0_14 = arith.constant 0 : index
    %7 = vector.load %arg9[%c0_13, %c0_14] : memref<8x1xf32, #tpu.memory_space<vmem>>, vector<8x1xf32>
    %c0_15 = arith.constant 0 : index
    %c0_16 = arith.constant 0 : index
    %8 = vector.load %arg1[%c0_15, %c0_16] : memref<16x16xf32, #tpu.memory_space<vmem>>, vector<16x16xf32>
    %cst = arith.constant dense<0.000000e+00> : vector<32x16xf32>
    %9 = tpu.matmul %0, %8, %cst {dimension_numbers = #tpu.dot_dimension_numbers<[1], [1], [0], [0], [0, 0, 1, 0], [], []>} : vector<32x16xf32>, vector<16x16xf32>, vector<32x16xf32> -> vector<32x16xf32>
    %10 = vector.broadcast %1 : vector<32x1xf32> to vector<32x16xf32>
    %11 = arith.addf %9, %10 : vector<32x16xf32>
    %cst_17 = arith.constant 0.000000e+00 : f32
    %12 = vector.broadcast %cst_17 : f32 to vector<32x16xf32>
    %13 = arith.maximumf %11, %12 : vector<32x16xf32>
    %cst_18 = arith.constant dense<0.000000e+00> : vector<16x16xf32>
    %14 = tpu.matmul %2, %13, %cst_18 {dimension_numbers = #tpu.dot_dimension_numbers<[1], [0], [0], [1], [0, 0, 1, 1], [], []>} : vector<16x32xf32>, vector<32x16xf32>, vector<16x16xf32> -> vector<16x16xf32>
    %15 = vector.broadcast %3 : vector<16x1xf32> to vector<16x16xf32>
    %16 = arith.addf %14, %15 : vector<16x16xf32>
    %cst_19 = arith.constant 0.000000e+00 : f32
    %17 = vector.broadcast %cst_19 : f32 to vector<16x16xf32>
    %18 = arith.maximumf %16, %17 : vector<16x16xf32>
    %cst_20 = arith.constant dense<0.000000e+00> : vector<8x16xf32>
    %19 = tpu.matmul %4, %18, %cst_20 {dimension_numbers = #tpu.dot_dimension_numbers<[1], [0], [0], [1], [0, 0, 1, 1], [], []>} : vector<8x16xf32>, vector<16x16xf32>, vector<8x16xf32> -> vector<8x16xf32>
    %20 = vector.broadcast %5 : vector<8x1xf32> to vector<8x16xf32>
    %21 = arith.addf %19, %20 : vector<8x16xf32>
    %cst_21 = arith.constant 0.000000e+00 : f32
    %22 = vector.broadcast %cst_21 : f32 to vector<8x16xf32>
    %23 = arith.maximumf %21, %22 : vector<8x16xf32>
    %cst_22 = arith.constant dense<0.000000e+00> : vector<8x16xf32>
    %24 = tpu.matmul %6, %23, %cst_22 {dimension_numbers = #tpu.dot_dimension_numbers<[1], [0], [0], [1], [0, 0, 1, 1], [], []>} : vector<8x8xf32>, vector<8x16xf32>, vector<8x16xf32> -> vector<8x16xf32>
    %25 = vector.broadcast %7 : vector<8x1xf32> to vector<8x16xf32>
    %26 = arith.addf %24, %25 : vector<8x16xf32>
    %c0_23 = arith.constant 0 : index
    %c0_24 = arith.constant 0 : index
    %27 = vector.load %arg10[%c0_23, %c0_24] : memref<8x16xf32, #tpu.memory_space<vmem>>, vector<8x16xf32>
    tpu.vector_store %arg10[%c0_23, %c0_24], %26 {strides = array<i32>} : memref<8x16xf32, #tpu.memory_space<vmem>>, vector<8x16xf32>,
    return
  }
  func.func @transform_0(%arg0: i32) -> (i32, i32) {
    %c0_i32 = arith.constant 0 : i32
    %c0_i32_0 = arith.constant 0 : i32
    return %arg0, %c0_i32 : i32, i32
  }
  func.func @transform_1(%arg0: i32) -> (i32, i32) {
    %c0_i32 = arith.constant 0 : i32
    %c0_i32_0 = arith.constant 0 : i32
    %c0_i32_1 = arith.constant 0 : i32
    return %c0_i32, %c0_i32_0 : i32, i32
  }
  func.func @transform_2(%arg0: i32) -> (i32, i32) {
    %c0_i32 = arith.constant 0 : i32
    %c0_i32_0 = arith.constant 0 : i32
    %c0_i32_1 = arith.constant 0 : i32
    return %c0_i32, %c0_i32_0 : i32, i32
  }
  func.func @transform_3(%arg0: i32) -> (i32, i32) {
    %c0_i32 = arith.constant 0 : i32
    %c0_i32_0 = arith.constant 0 : i32
    %c0_i32_1 = arith.constant 0 : i32
    return %c0_i32, %c0_i32_0 : i32, i32
  }
  func.func @transform_4(%arg0: i32) -> (i32, i32) {
    %c0_i32 = arith.constant 0 : i32
    %c0_i32_0 = arith.constant 0 : i32
    %c0_i32_1 = arith.constant 0 : i32
    return %c0_i32, %c0_i32_0 : i32, i32
  }
  func.func @transform_5(%arg0: i32) -> (i32, i32) {
    %c0_i32 = arith.constant 0 : i32
    %c0_i32_0 = arith.constant 0 : i32
    %c0_i32_1 = arith.constant 0 : i32
    return %c0_i32, %c0_i32_0 : i32, i32
  }
  func.func @transform_6(%arg0: i32) -> (i32, i32) {
    %c0_i32 = arith.constant 0 : i32
    %c0_i32_0 = arith.constant 0 : i32
    %c0_i32_1 = arith.constant 0 : i32
    return %c0_i32, %c0_i32_0 : i32, i32
  }
  func.func @transform_7(%arg0: i32) -> (i32, i32) {
    %c0_i32 = arith.constant 0 : i32
    %c0_i32_0 = arith.constant 0 : i32
    %c0_i32_1 = arith.constant 0 : i32
    return %c0_i32, %c0_i32_0 : i32, i32
  }
  func.func @transform_8(%arg0: i32) -> (i32, i32) {
    %c0_i32 = arith.constant 0 : i32
    %c0_i32_0 = arith.constant 0 : i32
    %c0_i32_1 = arith.constant 0 : i32
    return %c0_i32, %c0_i32_0 : i32, i32
  }
  func.func @transform_9(%arg0: i32) -> (i32, i32) {
    %c0_i32 = arith.constant 0 : i32
    %c0_i32_0 = arith.constant 0 : i32
    return %c0_i32, %arg0 : i32, i32
  }
}

</mosaic_0001>

<llo_original>
// kernel: tpu_custom_call.1
$region0: #{tpu_custom_call.1}
  #allocation0 [shape = 'u32[]', space=smem, size = 0x4, offset = 0x4, fixed_abs, tag = 'smem constant byte address 0x4 - core index']
  #allocation1 [shape = 'u32[144,128]{1,0:T(1,128)}', space=vmem, size = 0x12000, scoped, tag = 'internal scratch']
  %s0 = inlined_call_operand.vmem [shape: f32[16,16], index: 0, kind: input, shape index: {}]
  %s1 = inlined_call_operand.vmem [shape: f32[32,16], index: 1, kind: input, shape index: {}]
  %s2 = inlined_call_operand.vmem [shape: f32[32,1], index: 2, kind: input, shape index: {}]
  %s3 = inlined_call_operand.vmem [shape: f32[16,32], index: 3, kind: input, shape index: {}]
  %s4 = inlined_call_operand.vmem [shape: f32[16,1], index: 4, kind: input, shape index: {}]
  %s5 = inlined_call_operand.vmem [shape: f32[8,16], index: 5, kind: input, shape index: {}]
  %s6 = inlined_call_operand.vmem [shape: f32[8,1], index: 6, kind: input, shape index: {}]
  %s7 = inlined_call_operand.vmem [shape: f32[8,8], index: 7, kind: input, shape index: {}]
  %s8 = inlined_call_operand.vmem [shape: f32[8,1], index: 8, kind: input, shape index: {}]
  %s9 = inlined_call_operand.hbm [shape: f32[8,16], index: 9, kind: output, shape index: {}]
  %s10 = sld [smem:[#allocation0]]
  $region46: #{tpu_custom_call.1} parent=0
    _
  %s12 = ssub.s32 1, %s10
  %s13 = scalar_select 0, %s12, %s10
  $region1: #{tpu_custom_call.1} parent=0
    #allocation2 [shape = 'u8[4096]{0}', space=vmem, size = 0x1000, scoped, tag = 'output window, operand 0, single buffered']
    #allocation3 [shape = 's32[1]{0}', space=sflag, size = 0x4, scoped, tag = 'scoped memory for tpu_custom_call.1']
    %14 = vsyncpa [#allocation3], 0
    // Predicated region
    $region2: #{tpu_custom_call.1} parent=1 // pred_check
      _
    $region3: #{tpu_custom_call.1} parent=1 // pred_check_branch
      %16 = sbr.rel (0) target = $region5
    $region4: #{tpu_custom_call.1} parent=1 // pred_region
      _
    $region5: #{tpu_custom_call.1} parent=1 // pred_fallthru
      _
    // Predicated region
    $region6: #{tpu_custom_call.1} parent=1 // pred_check
      _
    $region7: #{tpu_custom_call.1} parent=1 // pred_check_branch
      %18 = sbr.rel (0) target = $region9
    $region8: #{tpu_custom_call.1} parent=1 // pred_region
      _
    $region9: #{tpu_custom_call.1} parent=1 // pred_fallthru
      _
    // Predicated region
    $region10: #{tpu_custom_call.1} parent=1 // pred_check
      _
    $region11: #{tpu_custom_call.1} parent=1 // pred_check_branch
      %20 = sbr.rel (0) target = $region13
    $region12: #{tpu_custom_call.1} parent=1 // pred_region
      _
    $region13: #{tpu_custom_call.1} parent=1 // pred_fallthru
      _
    // Predicated region
    $region14: #{tpu_custom_call.1} parent=1 // pred_check
      _
    $region15: #{tpu_custom_call.1} parent=1 // pred_check_branch
      %22 = sbr.rel (0) target = $region17
    $region16: #{tpu_custom_call.1} parent=1 // pred_region
      _
    $region17: #{tpu_custom_call.1} parent=1 // pred_fallthru
      _
    // Predicated region
    $region18: #{tpu_custom_call.1} parent=1 // pred_check
      _
    $region19: #{tpu_custom_call.1} parent=1 // pred_check_branch
      %24 = sbr.rel (0) target = $region21
    $region20: #{tpu_custom_call.1} parent=1 // pred_region
      _
    $region21: #{tpu_custom_call.1} parent=1 // pred_fallthru
      _
    // Predicated region
    $region22: #{tpu_custom_call.1} parent=1 // pred_check
      _
    $region23: #{tpu_custom_call.1} parent=1 // pred_check_branch
      %26 = sbr.rel (0) target = $region25
    $region24: #{tpu_custom_call.1} parent=1 // pred_region
      _
    $region25: #{tpu_custom_call.1} parent=1 // pred_fallthru
      _
    // Predicated region
    $region26: #{tpu_custom_call.1} parent=1 // pred_check
      _
    $region27: #{tpu_custom_call.1} parent=1 // pred_check_branch
      %28 = sbr.rel (0) target = $region29
    $region28: #{tpu_custom_call.1} parent=1 // pred_region
      _
    $region29: #{tpu_custom_call.1} parent=1 // pred_fallthru
      _
    // Predicated region
    $region30: #{tpu_custom_call.1} parent=1 // pred_check
      _
    $region31: #{tpu_custom_call.1} parent=1 // pred_check_branch
      %30 = sbr.rel (0) target = $region33
    $region32: #{tpu_custom_call.1} parent=1 // pred_region
      _
    $region33: #{tpu_custom_call.1} parent=1 // pred_fallthru
      _
    // Predicated region
    $region34: #{tpu_custom_call.1} parent=1 // pred_check
      _
    $region35: #{tpu_custom_call.1} parent=1 // pred_check_branch
      %32 = sbr.rel (0) target = $region37
    $region36: #{tpu_custom_call.1} parent=1 // pred_region
      _
    $region37: #{tpu_custom_call.1} parent=1 // pred_fallthru
      _
    %v33 = vld [vmem:[%s1] sm:$0xff]
    %v34 = vld [vmem:[%s1 + $0x8] sm:$0xff]
    %v35 = vld [vmem:[%s1 + $0x10] sm:$0xff]
    %v36 = vld [vmem:[%s1 + $0x18] sm:$0xff]
    %v37 = vld [vmem:[%s2] sm:$0xff]
    %v38 = vld [vmem:[%s2 + $0x8] sm:$0xff]
    %v39 = vld [vmem:[%s2 + $0x10] sm:$0xff]
    %v40 = vld [vmem:[%s2 + $0x18] sm:$0xff]
    %v41 = vld [vmem:[%s3] sm:$0xff]
    %v42 = vld [vmem:[%s3 + $0x8] sm:$0xff]
    %v43 = vld [vmem:[%s4] sm:$0xff]
    %v44 = vld [vmem:[%s4 + $0x8] sm:$0xff]
    %v45 = vld [vmem:[%s5] sm:$0xff]
    %v46 = vld [vmem:[%s6] sm:$0xff]
    %v47 = vld [vmem:[%s7] sm:$0xff]
    %v48 = vld [vmem:[%s8] sm:$0xff]
    %v49 = vld [vmem:[%s0] sm:$0xff]
    %v50 = vld [vmem:[%s0 + $0x8] sm:$0xff]
    %52 = vset.pattern.permute.xlu0 0
    %53 = vperm.xlu0 %52, %v37
    %v54 = vpop.permute.xlu0 %53
    %57 = vset.pattern.permute.xlu0 0
    %58 = vperm.xlu0 %57, %v38
    %v59 = vpop.permute.xlu0 %58
    %62 = vset.pattern.permute.xlu0 0
    %63 = vperm.xlu0 %62, %v39
    %v64 = vpop.permute.xlu0 %63
    %67 = vset.pattern.permute.xlu0 0
    %68 = vperm.xlu0 %67, %v40
    %v69 = vpop.permute.xlu0 %68
    %vm71 = vcmask 130048
    %v73 = vsel %vm71, %v33, 0
    %v76 = vsel %vm71, %v34, 0
    %v79 = vsel %vm71, %v35, 0
    %v82 = vsel %vm71, %v36, 0
    %v85 = vsel %vm71, %v49, 0
    %v88 = vsel %vm71, %v50, 0
    %90 = vmatprep.subr.mxu0 0.0
    %91 = vmatpush1.xpose.msra.mxu0 %v85
    %92 = vmatprep.subr.mxu0 0.0
    %93 = vmatpush1.xpose.msra.mxu0 %v88
    %94 = vmatprep.subr.mxu0 0.0
    %95 = vmatpush1.xpose.msra.mxu0 0.0
    %96 = vmatprep.subr.mxu0 0.0
    %97 = vmatpush1.xpose.msra.mxu0 0.0
    %98 = vmatprep.subr.mxu0 0.0
    %99 = vmatpush1.xpose.msra.mxu0 0.0
    %100 = vmatprep.subr.mxu0 0.0
    %101 = vmatpush1.xpose.msra.mxu0 0.0
    %102 = vmatprep.subr.mxu0 0.0
    %103 = vmatpush1.xpose.msra.mxu0 0.0
    %104 = vmatprep.subr.mxu0 0.0
    %105 = vmatpush1.xpose.msra.mxu0 0.0
    %106 = vmatprep.subr.mxu0 0.0
    %107 = vmatpush1.xpose.msra.mxu0 0.0
    %108 = vmatprep.subr.mxu0 0.0
    %109 = vmatpush1.xpose.msra.mxu0 0.0
    %110 = vmatprep.subr.mxu0 0.0
    %111 = vmatpush1.xpose.msra.mxu0 0.0
    %112 = vmatprep.subr.mxu0 0.0
    %113 = vmatpush1.xpose.msra.mxu0 0.0
    %114 = vmatprep.subr.mxu0 0.0
    %115 = vmatpush1.xpose.msra.mxu0 0.0
    %116 = vmatprep.subr.mxu0 0.0
    %117 = vmatpush1.xpose.msra.mxu0 0.0
    %118 = vmatprep.subr.mxu0 0.0
    %119 = vmatpush1.xpose.msra.mxu0 0.0
    %120 = vmatprep.subr.mxu0 0.0
    %121 = vmatpush1.xpose.msra.mxu0 0.0
    %122 = vmatprep.subr.mxu0 0.0
    %123 = vmatpush1.xpose.msra.mxu0 0.0
    %124 = vmatprep.subr.mxu0 0.0
    %125 = vmatpush1.xpose.msra.mxu0 0.0
    %126 = vmatprep.subr.mxu0 0.0
    %127 = vmatpush1.xpose.msra.mxu0 0.0
    %128 = vmatprep.subr.mxu0 0.0
    %129 = vmatpush1.xpose.msra.mxu0 0.0
    %130 = vmatprep.subr.mxu0 0.0
    %131 = vmatpush1.xpose.msra.mxu0 0.0
    %132 = vmatprep.subr.mxu0 0.0
    %133 = vmatpush1.xpose.msra.mxu0 0.0
    %134 = vmatprep.subr.mxu0 0.0
    %135 = vmatpush1.xpose.msra.mxu0 0.0
    %136 = vmatprep.subr.mxu0 0.0
    %137 = vmatpush1.xpose.msra.mxu0 0.0
    %138 = vmatprep.subr.mxu0 0.0
    %139 = vmatpush1.xpose.msra.mxu0 0.0
    %140 = vmatprep.subr.mxu0 0.0
    %141 = vmatpush1.xpose.msra.mxu0 0.0
    %142 = vmatprep.subr.mxu0 0.0
    %143 = vmatpush1.xpose.msra.mxu0 0.0
    %144 = vmatprep.subr.mxu0 0.0
    %145 = vmatpush1.xpose.msra.mxu0 0.0
    %146 = vmatprep.subr.mxu0 0.0
    %147 = vmatpush1.xpose.msra.mxu0 0.0
    %148 = vmatprep.subr.mxu0 0.0
    %149 = vmatpush1.xpose.msra.mxu0 0.0
    %150 = vmatprep.subr.mxu0 0.0
    %151 = vmatpush1.xpose.msra.mxu0 0.0
    %152 = vmatprep.subr.mxu0 0.0
    %153 = vmatpush1.xpose.msra.mxu0 0.0
    %154 = vmatprep.mubr.f32.mxu0 0.0
    %155 = vmatmul.mubr.f32.gmra.mrb[0].mxu0 %v73
    %v156 = vpop.f32.mrb[0].mxu0
    %v157 = vadd.f32 %v54, %v156
    %v158 = vpop.f32.mrb[0].mxu0
    %159 = vmatprep.mubr.f32.mxu0 0.0
    %160 = vmatmul.mubr.f32.gmra.mrb[0].mxu0 %v76
    %v161 = vpop.f32.mrb[0].mxu0
    %v162 = vadd.f32 %v59, %v161
    %v163 = vpop.f32.mrb[0].mxu0
    %164 = vmatprep.mubr.f32.mxu0 0.0
    %165 = vmatmul.mubr.f32.gmra.mrb[0].mxu0 %v79
    %v166 = vpop.f32.mrb[0].mxu0
    %v167 = vadd.f32 %v64, %v166
    %v168 = vpop.f32.mrb[0].mxu0
    %169 = vmatprep.mubr.f32.mxu0 0.0
    %170 = vmatmul.mubr.f32.gmra.mrb[0].mxu0 %v82
    %v171 = vpop.f32.mrb[0].mxu0
    %v172 = vadd.f32 %v69, %v171
    %v173 = vpop.f32.mrb[0].mxu0
    %174 = vdwg.mxu0
    %v175 = vmax.f32 %v157, 0.0
    %v176 = vmax.f32 %v162, 0.0
    %v177 = vmax.f32 %v167, 0.0
    %v178 = vmax.f32 %v172, 0.0
    %180 = vset.pattern.permute.xlu0 0
    %181 = vperm.xlu0 %180, %v43
    %v182 = vpop.permute.xlu0 %181
    %185 = vset.pattern.permute.xlu0 0
    %186 = vperm.xlu0 %185, %v44
    %v187 = vpop.permute.xlu0 %186
    %vm189 = vcmask 261120
    %v191 = vsel %vm189, %v41, 0
    %v194 = vsel %vm189, %v42, 0
    %196 = vmatprep.subr.mxu0 0.0
    %197 = vmatpush1.msra.mxu0 %v175
    %198 = vmatprep.subr.mxu0 0.0
    %199 = vmatpush1.msra.mxu0 %v176
    %200 = vmatprep.subr.mxu0 0.0
    %201 = vmatpush1.msra.mxu0 %v177
    %202 = vmatprep.subr.mxu0 0.0
    %203 = vmatpush1.msra.mxu0 %v178
    %204 = vmatprep.subr.mxu0 0.0
    %205 = vmatpush1.msra.mxu0 0.0
    %206 = vmatprep.subr.mxu0 0.0
    %207 = vmatpush1.msra.mxu0 0.0
    %208 = vmatprep.subr.mxu0 0.0
    %209 = vmatpush1.msra.mxu0 0.0
    %210 = vmatprep.subr.mxu0 0.0
    %211 = vmatpush1.msra.mxu0 0.0
    %212 = vmatprep.subr.mxu0 0.0
    %213 = vmatpush1.msra.mxu0 0.0
    %214 = vmatprep.subr.mxu0 0.0
    %215 = vmatpush1.msra.mxu0 0.0
    %216 = vmatprep.subr.mxu0 0.0
    %217 = vmatpush1.msra.mxu0 0.0
    %218 = vmatprep.subr.mxu0 0.0
    %219 = vmatpush1.msra.mxu0 0.0
    %220 = vmatprep.subr.mxu0 0.0
    %221 = vmatpush1.msra.mxu0 0.0
    %222 = vmatprep.subr.mxu0 0.0
    %223 = vmatpush1.msra.mxu0 0.0
    %224 = vmatprep.subr.mxu0 0.0
    %225 = vmatpush1.msra.mxu0 0.0
    %226 = vmatprep.subr.mxu0 0.0
    %227 = vmatpush1.msra.mxu0 0.0
    %228 = vmatprep.subr.mxu0 0.0
    %229 = vmatpush1.msra.mxu0 0.0
    %230 = vmatprep.subr.mxu0 0.0
    %231 = vmatpush1.msra.mxu0 0.0
    %232 = vmatprep.subr.mxu0 0.0
    %233 = vmatpush1.msra.mxu0 0.0
    %234 = vmatprep.subr.mxu0 0.0
    %235 = vmatpush1.msra.mxu0 0.0
    %236 = vmatprep.subr.mxu0 0.0
    %237 = vmatpush1.msra.mxu0 0.0
    %238 = vmatprep.subr.mxu0 0.0
    %239 = vmatpush1.msra.mxu0 0.0
    %240 = vmatprep.subr.mxu0 0.0
    %241 = vmatpush1.msra.mxu0 0.0
    %242 = vmatprep.subr.mxu0 0.0
    %243 = vmatpush1.msra.mxu0 0.0
    %244 = vmatprep.subr.mxu0 0.0
    %245 = vmatpush1.msra.mxu0 0.0
    %246 = vmatprep.subr.mxu0 0.0
    %247 = vmatpush1.msra.mxu0 0.0
    %248 = vmatprep.subr.mxu0 0.0
    %249 = vmatpush1.msra.mxu0 0.0
    %250 = vmatprep.subr.mxu0 0.0
    %251 = vmatpush1.msra.mxu0 0.0
    %252 = vmatprep.subr.mxu0 0.0
    %253 = vmatpush1.msra.mxu0 0.0
    %254 = vmatprep.subr.mxu0 0.0
    %255 = vmatpush1.msra.mxu0 0.0
    %256 = vmatprep.subr.mxu0 0.0
    %257 = vmatpush1.msra.mxu0 0.0
    %258 = vmatprep.subr.mxu0 0.0
    %259 = vmatpush1.msra.mxu0 0.0
    %260 = vmatprep.mubr.f32.mxu0 0.0
    %261 = vmatmul.mubr.f32.gmra.mrb[0].mxu0 %v191
    %v262 = vpop.f32.mrb[0].mxu0
    %v263 = vadd.f32 %v182, %v262
    %v264 = vpop.f32.mrb[0].mxu0
    %265 = vmatprep.mubr.f32.mxu0 0.0
    %266 = vmatmul.mubr.f32.gmra.mrb[0].mxu0 %v194
    %v267 = vpop.f32.mrb[0].mxu0
    %v268 = vadd.f32 %v187, %v267
    %v269 = vpop.f32.mrb[0].mxu0
    %270 = vdwg.mxu0
    %v271 = vmax.f32 %v263, 0.0
    %v272 = vmax.f32 %v268, 0.0
    %274 = vset.pattern.permute.xlu0 0
    %275 = vperm.xlu0 %274, %v46
    %v276 = vpop.permute.xlu0 %275
    %v279 = vsel %vm71, %v45, 0
    %281 = vmatprep.subr.mxu0 0.0
    %282 = vmatpush1.msra.mxu0 %v271
    %283 = vmatprep.subr.mxu0 0.0
    %284 = vmatpush1.msra.mxu0 %v272
    %285 = vmatprep.subr.mxu0 0.0
    %286 = vmatpush1.msra.mxu0 0.0
    %287 = vmatprep.subr.mxu0 0.0
    %288 = vmatpush1.msra.mxu0 0.0
    %289 = vmatprep.subr.mxu0 0.0
    %290 = vmatpush1.msra.mxu0 0.0
    %291 = vmatprep.subr.mxu0 0.0
    %292 = vmatpush1.msra.mxu0 0.0
    %293 = vmatprep.subr.mxu0 0.0
    %294 = vmatpush1.msra.mxu0 0.0
    %295 = vmatprep.subr.mxu0 0.0
    %296 = vmatpush1.msra.mxu0 0.0
    %297 = vmatprep.subr.mxu0 0.0
    %298 = vmatpush1.msra.mxu0 0.0
    %299 = vmatprep.subr.mxu0 0.0
    %300 = vmatpush1.msra.mxu0 0.0
    %301 = vmatprep.subr.mxu0 0.0
    %302 = vmatpush1.msra.mxu0 0.0
    %303 = vmatprep.subr.mxu0 0.0
    %304 = vmatpush1.msra.mxu0 0.0
    %305 = vmatprep.subr.mxu0 0.0
    %306 = vmatpush1.msra.mxu0 0.0
    %307 = vmatprep.subr.mxu0 0.0
    %308 = vmatpush1.msra.mxu0 0.0
    %309 = vmatprep.subr.mxu0 0.0
    %310 = vmatpush1.msra.mxu0 0.0
    %311 = vmatprep.subr.mxu0 0.0
    %312 = vmatpush1.msra.mxu0 0.0
    %313 = vmatprep.subr.mxu0 0.0
    %314 = vmatpush1.msra.mxu0 0.0
    %315 = vmatprep.subr.mxu0 0.0
    %316 = vmatpush1.msra.mxu0 0.0
    %317 = vmatprep.subr.mxu0 0.0
    %318 = vmatpush1.msra.mxu0 0.0
    %319 = vmatprep.subr.mxu0 0.0
    %320 = vmatpush1.msra.mxu0 0.0
    %321 = vmatprep.subr.mxu0 0.0
    %322 = vmatpush1.msra.mxu0 0.0
    %323 = vmatprep.subr.mxu0 0.0
    %324 = vmatpush1.msra.mxu0 0.0
    %325 = vmatprep.subr.mxu0 0.0
    %326 = vmatpush1.msra.mxu0 0.0
    %327 = vmatprep.subr.mxu0 0.0
    %328 = vmatpush1.msra.mxu0 0.0
    %329 = vmatprep.subr.mxu0 0.0
    %330 = vmatpush1.msra.mxu0 0.0
    %331 = vmatprep.subr.mxu0 0.0
    %332 = vmatpush1.msra.mxu0 0.0
    %333 = vmatprep.subr.mxu0 0.0
    %334 = vmatpush1.msra.mxu0 0.0
    %335 = vmatprep.subr.mxu0 0.0
    %336 = vmatpush1.msra.mxu0 0.0
    %337 = vmatprep.subr.mxu0 0.0
    %338 = vmatpush1.msra.mxu0 0.0
    %339 = vmatprep.subr.mxu0 0.0
    %340 = vmatpush1.msra.mxu0 0.0
    %341 = vmatprep.subr.mxu0 0.0
    %342 = vmatpush1.msra.mxu0 0.0
    %343 = vmatprep.subr.mxu0 0.0
    %344 = vmatpush1.msra.mxu0 0.0
    %345 = vmatprep.mubr.f32.mxu0 0.0
    %346 = vmatmul.mubr.f32.gmra.mrb[0].mxu0 %v279
    %v347 = vpop.f32.mrb[0].mxu0
    %v348 = vadd.f32 %v276, %v347
    %v349 = vpop.f32.mrb[0].mxu0
    %350 = vdwg.mxu0
    %v351 = vmax.f32 %v348, 0.0
    %353 = vset.pattern.permute.xlu0 0
    %354 = vperm.xlu0 %353, %v48
    %v355 = vpop.permute.xlu0 %354
    %vm357 = vcmask 64512
    %v359 = vsel %vm357, %v47, 0
    %361 = vmatprep.subr.mxu0 0.0
    %362 = vmatpush1.msra.mxu0 %v351
    %363 = vmatprep.subr.mxu0 0.0
    %364 = vmatpush1.msra.mxu0 0.0
    %365 = vmatprep.subr.mxu0 0.0
    %366 = vmatpush1.msra.mxu0 0.0
    %367 = vmatprep.subr.mxu0 0.0
    %368 = vmatpush1.msra.mxu0 0.0
    %369 = vmatprep.subr.mxu0 0.0
    %370 = vmatpush1.msra.mxu0 0.0
    %371 = vmatprep.subr.mxu0 0.0
    %372 = vmatpush1.msra.mxu0 0.0
    %373 = vmatprep.subr.mxu0 0.0
    %374 = vmatpush1.msra.mxu0 0.0
    %375 = vmatprep.subr.mxu0 0.0
    %376 = vmatpush1.msra.mxu0 0.0
    %377 = vmatprep.subr.mxu0 0.0
    %378 = vmatpush1.msra.mxu0 0.0
    %379 = vmatprep.subr.mxu0 0.0
    %380 = vmatpush1.msra.mxu0 0.0
    %381 = vmatprep.subr.mxu0 0.0
    %382 = vmatpush1.msra.mxu0 0.0
    %383 = vmatprep.subr.mxu0 0.0
    %384 = vmatpush1.msra.mxu0 0.0
    %385 = vmatprep.subr.mxu0 0.0
    %386 = vmatpush1.msra.mxu0 0.0
    %387 = vmatprep.subr.mxu0 0.0
    %388 = vmatpush1.msra.mxu0 0.0
    %389 = vmatprep.subr.mxu0 0.0
    %390 = vmatpush1.msra.mxu0 0.0
    %391 = vmatprep.subr.mxu0 0.0
    %392 = vmatpush1.msra.mxu0 0.0
    %393 = vmatprep.subr.mxu0 0.0
    %394 = vmatpush1.msra.mxu0 0.0
    %395 = vmatprep.subr.mxu0 0.0
    %396 = vmatpush1.msra.mxu0 0.0
    %397 = vmatprep.subr.mxu0 0.0
    %398 = vmatpush1.msra.mxu0 0.0
    %399 = vmatprep.subr.mxu0 0.0
    %400 = vmatpush1.msra.mxu0 0.0
    %401 = vmatprep.subr.mxu0 0.0
    %402 = vmatpush1.msra.mxu0 0.0
    %403 = vmatprep.subr.mxu0 0.0
    %404 = vmatpush1.msra.mxu0 0.0
    %405 = vmatprep.subr.mxu0 0.0
    %406 = vmatpush1.msra.mxu0 0.0
    %407 = vmatprep.subr.mxu0 0.0
    %408 = vmatpush1.msra.mxu0 0.0
    %409 = vmatprep.subr.mxu0 0.0
    %410 = vmatpush1.msra.mxu0 0.0
    %411 = vmatprep.subr.mxu0 0.0
    %412 = vmatpush1.msra.mxu0 0.0
    %413 = vmatprep.subr.mxu0 0.0
    %414 = vmatpush1.msra.mxu0 0.0
    %415 = vmatprep.subr.mxu0 0.0
    %416 = vmatpush1.msra.mxu0 0.0
    %417 = vmatprep.subr.mxu0 0.0
    %418 = vmatpush1.msra.mxu0 0.0
    %419 = vmatprep.subr.mxu0 0.0
    %420 = vmatpush1.msra.mxu0 0.0
    %421 = vmatprep.subr.mxu0 0.0
    %422 = vmatpush1.msra.mxu0 0.0
    %423 = vmatprep.subr.mxu0 0.0
    %424 = vmatpush1.msra.mxu0 0.0
    %425 = vmatprep.mubr.f32.mxu0 0.0
    %426 = vmatmul.mubr.f32.gmra.mrb[0].mxu0 %v359
    %v427 = vpop.f32.mrb[0].mxu0
    %v428 = vadd.f32 %v355, %v427
    %v429 = vpop.f32.mrb[0].mxu0
    %430 = vdwg.mxu0
    %431 = vst.msk [vmem:[#allocation2] sm:$0xff] %vm71, %v428
    // Predicated region
    $region38: #{tpu_custom_call.1} parent=1 // pred_check
      _
    $region39: #{tpu_custom_call.1} parent=1 // pred_check_branch
      %433 = sbr.rel (0) target = $region41
    $region40: #{tpu_custom_call.1} parent=1 // pred_region
      %s435 = ssub.s32 128, 128
      %436 = vsyncadd [#allocation3], %s435
      %s438 = sshll.u32 [#allocation2], 4
      %s439 = int_to_ptr.vmem [resolvable:$true] %s438
      %441 = dma.vmem_to_hbm [thread:$0]  %s439, 128, %s9, [#allocation3]
    $region41: #{tpu_custom_call.1} parent=1 // pred_fallthru
      _
    // Predicated region
    $region42: #{tpu_custom_call.1} parent=1 // pred_check
      _
    $region43: #{tpu_custom_call.1} parent=1 // pred_check_branch
      %443 = sbr.rel (0) target = $region45
    $region44: #{tpu_custom_call.1} parent=1 // pred_region
      %444 = dma.done [#allocation3], 128
    $region45: #{tpu_custom_call.1} parent=1 // pred_fallthru
      _
    %445 = vsyncpa [#allocation3], 1

</llo_original>
